<compile_context>
chip_gen: v6e
topology: v6e:2x2x1
jax: 0.10.0
libtpu: 0.0.40
codegen_flags: <defaults>
</compile_context>

<pallas_src>
import jax
import jax.numpy as jnp
from jax.experimental import pallas as pl
from jax.experimental.pallas import tpu as pltpu

# Logical (PyTorch) sizes.
IN_F = 372
HID_F = 52
OUT_F = 52

# Only the hidden dim is padded (lane-aligned intermediate); x / output stay unpadded.
HID_P = 128


def enn_kernel(x_ref, w1_ref, b1_ref, w2_ref, b2_ref, o_ref):
    # Layer 1: (tb, 372) @ (372, 128) + (1, 128); f32 accumulation on the MXU.
    h = jnp.dot(x_ref[...], w1_ref[...],
                preferred_element_type=jnp.float32) + b1_ref[...]
    h = jnp.maximum(h, 0.0)                                   # ReLU
    # Layer 2: (tb, 128) @ (128, 52) + (1, 52).
    y = jnp.dot(h, w2_ref[...],
                preferred_element_type=jnp.float32) + b2_ref[...]
    o_ref[...] = jax.nn.sigmoid(y)                            # Sigmoid, f32 out


def _round_up(n, m):
    return ((n + m - 1) // m) * m


def _pad2(a, rows, cols):
    return jnp.pad(a, ((0, rows - a.shape[0]), (0, cols - a.shape[1])))


def enn_forward(x, w1, b1, w2, b2, *, tb=1024):
    """x: (B, 372) f32. Params are un-padded, pre-transposed (see init_params)."""
    B = x.shape[0]

    # Batch tile: multiple of 8 (sublane); keep >=4 grid steps when possible so
    # both v7x TensorCores get work (free / neutral on v5e & v6e single-TC).
    tb = min(tb, _round_up(pl.cdiv(B, 4), 8))
    tb = max(8, _round_up(tb, 8))
    grid = (pl.cdiv(B, tb),)

    # Pad only the small weight tensors: hidden 52 -> 128.  The zero columns of
    # w1/b1 make hidden cols 52..127 exactly 0 through ReLU, and the zero rows of
    # w2 contribute exactly 0 to the second matmul, so the math is unchanged.
    w1p = _pad2(w1, IN_F, HID_P)
    b1p = _pad2(b1, 1, HID_P)
    w2p = _pad2(w2, HID_P, OUT_F)
    # b2 stays (1, 52).

    cost = pl.CostEstimate(
        flops=2 * B * (IN_F * HID_P + HID_P * OUT_F),
        transcendentals=B * OUT_F,
        bytes_accessed=B * (IN_F + OUT_F) * 4
        + (IN_F * HID_P + HID_P * OUT_F + HID_P + OUT_F) * 4,
    )

    return pl.pallas_call(
        enn_kernel,
        out_shape=jax.ShapeDtypeStruct((B, OUT_F), jnp.float32),
        grid=grid,
        in_specs=[
            pl.BlockSpec((tb, IN_F), lambda i: (i, 0)),      # x streams, unpadded K=372
            pl.BlockSpec((IN_F, HID_P), lambda i: (0, 0)),   # weights stay VMEM-resident
            pl.BlockSpec((1, HID_P), lambda i: (0, 0)),
            pl.BlockSpec((HID_P, OUT_F), lambda i: (0, 0)),
            pl.BlockSpec((1, OUT_F), lambda i: (0, 0)),
        ],
        out_specs=pl.BlockSpec((tb, OUT_F), lambda i: (i, 0)),  # direct (B, 52) write
        compiler_params=pltpu.CompilerParams(
            dimension_semantics=("parallel",),               # dual-TC on v7x
            vmem_limit_bytes=32 * 1024 * 1024,               # ~5 MiB actual @ tb=1024
        ),
        cost_estimate=cost,
    )(x, w1p, b1p, w2p, b2)


def init_params(key):
    # Deterministic init mimicking torch.nn.Linear default: U(-1/sqrt(fan_in), 1/sqrt(fan_in)).
    k1, k2, k3, k4 = jax.random.split(key, 4)
    bound1 = 1.0 / jnp.sqrt(jnp.float32(IN_F))
    bound2 = 1.0 / jnp.sqrt(jnp.float32(HID_F))
    w1 = jax.random.uniform(k1, (IN_F, HID_F), jnp.float32, -bound1, bound1)
    b1 = jax.random.uniform(k2, (1, HID_F), jnp.float32, -bound1, bound1)
    w2 = jax.random.uniform(k3, (HID_F, OUT_F), jnp.float32, -bound2, bound2)
    b2 = jax.random.uniform(k4, (1, OUT_F), jnp.float32, -bound2, bound2)
    return w1, b1, w2, b2


if __name__ == "__main__":
    key = jax.random.PRNGKey(0)
    kx, kp = jax.random.split(key)

    B = 200  # not a multiple of the batch tile -> exercises the masked edge block
    x = jax.random.normal(kx, (B, IN_F), jnp.float32)
    w1, b1, w2, b2 = init_params(kp)

    out = enn_forward(x, w1, b1, w2, b2)   # tb clamps to 56 here -> grid=(4,)
    out = jax.block_until_ready(out)
    assert out.shape == (B, OUT_F)

    # Full-precision f32 reference matching the PyTorch module's semantics.
    h_ref = jnp.maximum(
        jnp.dot(x, w1, precision=jax.lax.Precision.HIGHEST) + b1, 0.0)
    ref = jax.nn.sigmoid(
        jnp.dot(h_ref, w2, precision=jax.lax.Precision.HIGHEST) + b2)
    assert jnp.allclose(out, ref, atol=1e-2, rtol=1e-2), (
        float(jnp.max(jnp.abs(out - ref))))

    print("KERNEL_OK")
</pallas_src>

<mosaic_0001>
module attributes {stable_mosaic.version = 11 : i64} {
  func.func @enn_kernel(%arg0: i32, %arg1: memref<56x372xf32, #tpu.memory_space<vmem>>, %arg2: memref<372x128xf32, #tpu.memory_space<vmem>>, %arg3: memref<1x128xf32, #tpu.memory_space<vmem>>, %arg4: memref<128x52xf32, #tpu.memory_space<vmem>>, %arg5: memref<1x52xf32, #tpu.memory_space<vmem>>, %arg6: memref<56x52xf32, #tpu.memory_space<vmem>>) attributes {dimension_semantics = [#tpu.dimension_semantics<parallel>], iteration_bounds = array<i64: 4>, scalar_prefetch = 0 : i64, scratch_operands = 0 : i64, tpu.core_type = #tpu.core_type<tc>, window_params = [{transform_indices = @transform_0, window_bounds = array<i64: 56, 372>}, {pipeline_mode = #tpu.pipeline_mode<synchronous>, transform_indices = @transform_1, window_bounds = array<i64: 372, 128>}, {pipeline_mode = #tpu.pipeline_mode<synchronous>, transform_indices = @transform_2, window_bounds = array<i64: 1, 128>}, {pipeline_mode = #tpu.pipeline_mode<synchronous>, transform_indices = @transform_3, window_bounds = array<i64: 128, 52>}, {pipeline_mode = #tpu.pipeline_mode<synchronous>, transform_indices = @transform_4, window_bounds = array<i64: 1, 52>}, {transform_indices = @transform_5, window_bounds = array<i64: 56, 52>}]} {
    %c0 = arith.constant 0 : index
    %c0_0 = arith.constant 0 : index
    %0 = vector.load %arg1[%c0, %c0_0] : memref<56x372xf32, #tpu.memory_space<vmem>>, vector<56x372xf32>
    %c0_1 = arith.constant 0 : index
    %c0_2 = arith.constant 0 : index
    %1 = vector.load %arg2[%c0_1, %c0_2] : memref<372x128xf32, #tpu.memory_space<vmem>>, vector<372x128xf32>
    %cst = arith.constant dense<0.000000e+00> : vector<56x128xf32>
    %2 = tpu.matmul %0, %1, %cst {dimension_numbers = #tpu.dot_dimension_numbers<[1], [0], [0], [1], [0, 0, 1, 1], [], []>} : vector<56x372xf32>, vector<372x128xf32>, vector<56x128xf32> -> vector<56x128xf32>
    %c0_3 = arith.constant 0 : index
    %c0_4 = arith.constant 0 : index
    %3 = vector.load %arg3[%c0_3, %c0_4] : memref<1x128xf32, #tpu.memory_space<vmem>>, vector<1x128xf32>
    %4 = vector.broadcast %3 : vector<1x128xf32> to vector<56x128xf32>
    %5 = arith.addf %2, %4 : vector<56x128xf32>
    %cst_5 = arith.constant 0.000000e+00 : f32
    %6 = vector.broadcast %cst_5 : f32 to vector<56x128xf32>
    %7 = arith.maximumf %5, %6 : vector<56x128xf32>
    %c0_6 = arith.constant 0 : index
    %c0_7 = arith.constant 0 : index
    %8 = vector.load %arg4[%c0_6, %c0_7] : memref<128x52xf32, #tpu.memory_space<vmem>>, vector<128x52xf32>
    %cst_8 = arith.constant dense<0.000000e+00> : vector<56x52xf32>
    %9 = tpu.matmul %7, %8, %cst_8 {dimension_numbers = #tpu.dot_dimension_numbers<[1], [0], [0], [1], [0, 0, 1, 1], [], []>} : vector<56x128xf32>, vector<128x52xf32>, vector<56x52xf32> -> vector<56x52xf32>
    %c0_9 = arith.constant 0 : index
    %c0_10 = arith.constant 0 : index
    %10 = vector.load %arg5[%c0_9, %c0_10] : memref<1x52xf32, #tpu.memory_space<vmem>>, vector<1x52xf32>
    %11 = vector.broadcast %10 : vector<1x52xf32> to vector<56x52xf32>
    %12 = arith.addf %9, %11 : vector<56x52xf32>
    %13 = arith.negf %12 : vector<56x52xf32>
    %14 = math.exp %13 : vector<56x52xf32>
    %cst_11 = arith.constant 1.000000e+00 : f32
    %15 = vector.broadcast %cst_11 : f32 to vector<56x52xf32>
    %16 = arith.addf %15, %14 : vector<56x52xf32>
    %17 = arith.divf %15, %16 : vector<56x52xf32>
    %c0_12 = arith.constant 0 : index
    %c0_13 = arith.constant 0 : index
    %18 = vector.load %arg6[%c0_12, %c0_13] : memref<56x52xf32, #tpu.memory_space<vmem>>, vector<56x52xf32>
    tpu.vector_store %arg6[%c0_12, %c0_13], %17 {strides = array<i32>} : memref<56x52xf32, #tpu.memory_space<vmem>>, vector<56x52xf32>,
    return
  }
  func.func @transform_0(%arg0: i32) -> (i32, i32) {
    %c0_i32 = arith.constant 0 : i32
    %c0_i32_0 = arith.constant 0 : i32
    return %arg0, %c0_i32 : i32, i32
  }
  func.func @transform_1(%arg0: i32) -> (i32, i32) {
    %c0_i32 = arith.constant 0 : i32
    %c0_i32_0 = arith.constant 0 : i32
    %c0_i32_1 = arith.constant 0 : i32
    return %c0_i32, %c0_i32_0 : i32, i32
  }
  func.func @transform_2(%arg0: i32) -> (i32, i32) {
    %c0_i32 = arith.constant 0 : i32
    %c0_i32_0 = arith.constant 0 : i32
    %c0_i32_1 = arith.constant 0 : i32
    return %c0_i32, %c0_i32_0 : i32, i32
  }
  func.func @transform_3(%arg0: i32) -> (i32, i32) {
    %c0_i32 = arith.constant 0 : i32
    %c0_i32_0 = arith.constant 0 : i32
    %c0_i32_1 = arith.constant 0 : i32
    return %c0_i32, %c0_i32_0 : i32, i32
  }
  func.func @transform_4(%arg0: i32) -> (i32, i32) {
    %c0_i32 = arith.constant 0 : i32
    %c0_i32_0 = arith.constant 0 : i32
    %c0_i32_1 = arith.constant 0 : i32
    return %c0_i32, %c0_i32_0 : i32, i32
  }
  func.func @transform_5(%arg0: i32) -> (i32, i32) {
    %c0_i32 = arith.constant 0 : i32
    %c0_i32_0 = arith.constant 0 : i32
    return %arg0, %c0_i32 : i32, i32
  }
}

</mosaic_0001>

<llo_original>
// kernel: tpu_custom_call.1
$region0: #{tpu_custom_call.1}
  #allocation0 [shape = 'u32[]', space=smem, size = 0x4, offset = 0x4, fixed_abs, tag = 'smem constant byte address 0x4 - core index']
  #allocation1 [shape = 'u32[144,128]{1,0:T(1,128)}', space=vmem, size = 0x12000, scoped, tag = 'internal scratch']
  %s0 = inlined_call_operand.hbm [shape: f32[200,372], index: 0, kind: input, shape index: {}]
  %s1 = inlined_call_operand.hbm [shape: f32[372,128], index: 1, kind: input, shape index: {}]
  %s2 = inlined_call_operand.vmem [shape: f32[1,128], index: 2, kind: input, shape index: {}]
  %s3 = inlined_call_operand.vmem [shape: f32[128,52], index: 3, kind: input, shape index: {}]
  %s4 = inlined_call_operand.vmem [shape: f32[1,52], index: 4, kind: input, shape index: {}]
  %s5 = inlined_call_operand.vmem [shape: f32[200,52], index: 5, kind: output, shape index: {}]
  %s6 = sld [smem:[#allocation0]]
  $region109: #{tpu_custom_call.1} parent=0
    _
  %s8 = ssub.s32 1, %s6
  %s9 = scalar_select 0, %s8, %s6
  $region1: #{tpu_custom_call.1} parent=0
    #allocation2 [shape = 'u8[172032]{0}', space=vmem, size = 0x2a000, scoped, tag = 'input window, operand 0']
    #allocation3 [shape = 's32[2]{0}', space=sflag, size = 0x8, scoped, tag = 'scoped memory for tpu_custom_call.1']
    #allocation4 [shape = 'u8[192512]{0}', space=vmem, size = 0x2f000, scoped, tag = 'input window, operand 1, single buffered']
    #allocation5 [shape = 's32[1]{0}', space=sflag, size = 0x4, scoped, tag = 'scoped memory for tpu_custom_call.1']
    #allocation6 [shape = 'u8[57344]{0}', space=vmem, size = 0xe000, scoped, tag = 'output window, operand 0']
    %10 = vsyncpa [#allocation3], 0
    %s11 = scalar_lea.sflag [#allocation3], 1
    %12 = vsyncpa %s11, 0
    %13 = vsyncpa [#allocation5], 0
    loop: start=0, step=1, limit=6
    $region2: #{tpu_custom_call.1} parent=1 // loop_pre_header
      _
    $region3: #{tpu_custom_call.1} parent=1 // loop_header
      %s15 = sphi 0, %s19
      %p16 = scmp.ge.s32.totalorder %s15, 6
      %s25 = sphi 0, %s27
      %s28 = sphi 0, %s25
      %s29 = sphi 0, %s28
      %s45 = sphi 0, %s29
      %s49 = sphi 0, %s49
      %s51 = sphi 0, %s49
      %s52 = sphi 0, %s51
      %s66 = sphi 0, %s52
      %s70 = sphi 0, %s70
      %s72 = sphi 0, %s70
      %s73 = sphi 0, %s72
      %s87 = sphi 0, %s73
      %s91 = sphi 0, %s91
      %s93 = sphi 0, %s91
      %s94 = sphi 0, %s93
      %s108 = sphi 0, %s94
      %s112 = sphi 0, %s112
      %s114 = sphi 0, %s112
      %s115 = sphi 0, %s114
      %s129 = sphi 0, %s115
      %s135 = sphi 0, %s137
      %s138 = sphi 0, %s135
      %s139 = sphi 0, %s138
      %s155 = sphi 0, %s139
    $region4: #{tpu_custom_call.1} parent=1 // loop_header_branch
      %18 = sbr.rel (%p16) target = $region8
    $region5: #{tpu_custom_call.1} parent=1 // loop_body
      %s20 = ssub.s32 %s15, 1
      %s21 = ssub.s32 %s15, 2
      %s22 = sadd.s32 %s15, 1
      %s23 = ssub.s32 %s15, %s22
      %p24 = scmp.eq.s32.totalorder %s23, 0
      %s26 = sadd.s32 %s25, 1
      %s27 = scalar_select %p24, %s25, %s26
      %p30 = pneg %p24
      %p31 = scmp.eq.s32.totalorder %s15, 3
      %p32 = por %p30, %p31
      %p33 = scmp.ne.s32.totalorder %s25, %s28
      %p34 = scmp.eq.s32.totalorder %s15, 0
      %p35 = por %p33, %p34
      %p36 = scmp.ne.s32.totalorder %s25, %s28
      %p37 = scmp.eq.s32.totalorder %s20, 3
      %p38 = por %p36, %p37
      %p39 = scmp.ne.s32.totalorder %s28, %s29
      %p40 = scmp.eq.s32.totalorder %s20, 0
      %p41 = por %p39, %p40
      %p42 = scmp.ne.s32.totalorder %s28, %s29
      %p43 = scmp.eq.s32.totalorder %s21, 3
      %p44 = por %p42, %p43
      %p46 = scmp.ne.s32.totalorder %s29, %s45
      %p47 = scmp.eq.s32.totalorder %s21, 0
      %p48 = por %p46, %p47
      %s50 = sadd.s32 %s49, 1
      %p53 = scmp.eq.s32.totalorder %s15, 3
      %p54 = scmp.ne.s32.totalorder %s49, %s51
      %p55 = scmp.eq.s32.totalorder %s15, 0
      %p56 = por %p54, %p55
      %p57 = scmp.ne.s32.totalorder %s49, %s51
      %p58 = scmp.eq.s32.totalorder %s20, 3
      %p59 = por %p57, %p58
      %p60 = scmp.ne.s32.totalorder %s51, %s52
      %p61 = scmp.eq.s32.totalorder %s20, 0
      %p62 = por %p60, %p61
      %p63 = scmp.ne.s32.totalorder %s51, %s52
      %p64 = scmp.eq.s32.totalorder %s21, 3
      %p65 = por %p63, %p64
      %p67 = scmp.ne.s32.totalorder %s52, %s66
      %p68 = scmp.eq.s32.totalorder %s21, 0
      %p69 = por %p67, %p68
      %s71 = sadd.s32 %s70, 1
      %p74 = scmp.eq.s32.totalorder %s15, 3
      %p75 = scmp.ne.s32.totalorder %s70, %s72
      %p76 = scmp.eq.s32.totalorder %s15, 0
      %p77 = por %p75, %p76
      %p78 = scmp.ne.s32.totalorder %s70, %s72
      %p79 = scmp.eq.s32.totalorder %s20, 3
      %p80 = por %p78, %p79
      %p81 = scmp.ne.s32.totalorder %s72, %s73
      %p82 = scmp.eq.s32.totalorder %s20, 0
      %p83 = por %p81, %p82
      %p84 = scmp.ne.s32.totalorder %s72, %s73
      %p85 = scmp.eq.s32.totalorder %s21, 3
      %p86 = por %p84, %p85
      %p88 = scmp.ne.s32.totalorder %s73, %s87
      %p89 = scmp.eq.s32.totalorder %s21, 0
      %p90 = por %p88, %p89
      %s92 = sadd.s32 %s91, 1
      %p95 = scmp.eq.s32.totalorder %s15, 3
      %p96 = scmp.ne.s32.totalorder %s91, %s93
      %p97 = scmp.eq.s32.totalorder %s15, 0
      %p98 = por %p96, %p97
      %p99 = scmp.ne.s32.totalorder %s91, %s93
      %p100 = scmp.eq.s32.totalorder %s20, 3
      %p101 = por %p99, %p100
      %p102 = scmp.ne.s32.totalorder %s93, %s94
      %p103 = scmp.eq.s32.totalorder %s20, 0
      %p104 = por %p102, %p103
      %p105 = scmp.ne.s32.totalorder %s93, %s94
      %p106 = scmp.eq.s32.totalorder %s21, 3
      %p107 = por %p105, %p106
      %p109 = scmp.ne.s32.totalorder %s94, %s108
      %p110 = scmp.eq.s32.totalorder %s21, 0
      %p111 = por %p109, %p110
      %s113 = sadd.s32 %s112, 1
      %p116 = scmp.eq.s32.totalorder %s15, 3
      %p117 = scmp.ne.s32.totalorder %s112, %s114
      %p118 = scmp.eq.s32.totalorder %s15, 0
      %p119 = por %p117, %p118
      %p120 = scmp.ne.s32.totalorder %s112, %s114
      %p121 = scmp.eq.s32.totalorder %s20, 3
      %p122 = por %p120, %p121
      %p123 = scmp.ne.s32.totalorder %s114, %s115
      %p124 = scmp.eq.s32.totalorder %s20, 0
      %p125 = por %p123, %p124
      %p126 = scmp.ne.s32.totalorder %s114, %s115
      %p127 = scmp.eq.s32.totalorder %s21, 3
      %p128 = por %p126, %p127
      %p130 = scmp.ne.s32.totalorder %s115, %s129
      %p131 = scmp.eq.s32.totalorder %s21, 0
      %p132 = por %p130, %p131
      %s133 = ssub.s32 %s15, %s22
      %p134 = scmp.eq.s32.totalorder %s133, 0
      %s136 = sadd.s32 %s135, 1
      %s137 = scalar_select %p134, %s135, %s136
      %p140 = pneg %p134
      %p141 = scmp.eq.s32.totalorder %s15, 3
      %p142 = por %p140, %p141
      %p143 = scmp.ne.s32.totalorder %s135, %s138
      %p144 = scmp.eq.s32.totalorder %s15, 0
      %p145 = por %p143, %p144
      %p146 = scmp.ne.s32.totalorder %s135, %s138
      %p147 = scmp.eq.s32.totalorder %s20, 3
      %p148 = por %p146, %p147
      %p149 = scmp.ne.s32.totalorder %s138, %s139
      %p150 = scmp.eq.s32.totalorder %s20, 0
      %p151 = por %p149, %p150
      %p152 = scmp.ne.s32.totalorder %s138, %s139
      %p153 = scmp.eq.s32.totalorder %s21, 3
      %p154 = por %p152, %p153
      %p156 = scmp.ne.s32.totalorder %s139, %s155
      %p157 = scmp.eq.s32.totalorder %s21, 0
      %p158 = por %p156, %p157
      %p159 = scmp.le.s32.totalorder 1, %s15
      %p160 = scmp.lt.s32.totalorder %s15, 5
      %p161 = pnand %p159, %p160
      %p162 = pneg %p161
      // Predicated region
      $region9: #{tpu_custom_call.1} parent=5 // pred_check
        _
      $region10: #{tpu_custom_call.1} parent=5 // pred_check_branch
        %164 = sbr.rel (%p161) target = $region12
      $region11: #{tpu_custom_call.1} parent=5 // pred_region
        %s165 = ssub.s32 %s15, 1
        // Predicated region
        $region13: #{tpu_custom_call.1} parent=11 // pred_check
          %p166 = pneg %p62
        $region14: #{tpu_custom_call.1} parent=11 // pred_check_branch
          %168 = sbr.rel (%p166) target = $region16
        $region15: #{tpu_custom_call.1} parent=11 // pred_region
          %s170 = ssub.s32 6016, 6016
          %171 = vsyncadd [#allocation5], %s170
          %s172 = sshll.u32 [#allocation4], 4
          %s173 = int_to_ptr.vmem [resolvable:$true] %s172
          %178 = dma.hbm_to_vmem [thread:$0]  %s1, 6016, %s173, [#allocation5], 128, 128, 8
        $region16: #{tpu_custom_call.1} parent=11 // pred_fallthru
          _
        // Predicated region
        $region17: #{tpu_custom_call.1} parent=11 // pred_check
          %p179 = pneg %p83
        $region18: #{tpu_custom_call.1} parent=11 // pred_check_branch
          %181 = sbr.rel (%p179) target = $region20
        $region19: #{tpu_custom_call.1} parent=11 // pred_region
          _
        $region20: #{tpu_custom_call.1} parent=11 // pred_fallthru
          _
        // Predicated region
        $region21: #{tpu_custom_call.1} parent=11 // pred_check
          %p182 = pneg %p104
        $region22: #{tpu_custom_call.1} parent=11 // pred_check_branch
          %184 = sbr.rel (%p182) target = $region24
        $region23: #{tpu_custom_call.1} parent=11 // pred_region
          _
        $region24: #{tpu_custom_call.1} parent=11 // pred_fallthru
          _
        // Predicated region
        $region25: #{tpu_custom_call.1} parent=11 // pred_check
          %p185 = pneg %p125
        $region26: #{tpu_custom_call.1} parent=11 // pred_check_branch
          %187 = sbr.rel (%p185) target = $region28
        $region27: #{tpu_custom_call.1} parent=11 // pred_region
          _
        $region28: #{tpu_custom_call.1} parent=11 // pred_fallthru
          _
      $region12: #{tpu_custom_call.1} parent=5 // pred_fallthru
        _
      %p188 = scmp.lt.s32.totalorder %s15, 4
      // Predicated region
      $region29: #{tpu_custom_call.1} parent=5 // pred_check
        %p189 = pneg %p188
      $region30: #{tpu_custom_call.1} parent=5 // pred_check_branch
        %191 = sbr.rel (%p189) target = $region32
      $region31: #{tpu_custom_call.1} parent=5 // pred_region
        // Predicated region
        $region33: #{tpu_custom_call.1} parent=31 // pred_check
          %p192 = pneg %p35
        $region34: #{tpu_custom_call.1} parent=31 // pred_check_branch
          %194 = sbr.rel (%p192) target = $region36
        $region35: #{tpu_custom_call.1} parent=31 // pred_region
          %s195 = sand.u32 %s25, 1
          %s196 = scalar_lea.sflag [#allocation3], %s195
          %s197 = sand.u32 %s25, 1
          %s198 = smul.addr %s197, 168
          %s199 = scalar_lea.vmem [#allocation2], %s198
          %s200 = smul.u32 7, %s15
          %s201 = ssub.s32 25, %s200
          %p202 = scmp.lt.s32.totalorder %s201, 7
          %s203 = scalar_select %p202, %s201, 7
          %s204 = smul.u32 128, %s203
          %s205 = smul.u32 %s204, 3
          %s207 = ssub.s32 2688, %s205
          %208 = vsyncadd %s196, %s207
          %p209 = scmp.ne.s32.totalorder 0, %s205
          %s210 = smul.addr %s200, 3
          %s211 = smul.addr %s210, 128
          %s212 = scalar_lea.hbm %s0, %s211
          %s213 = smul.u32 24, %s203
          %s214 = sshll.u32 %s199, 4
          %s215 = int_to_ptr.vmem [resolvable:$true] %s214
          %s216 = sshll.u32 %s213, 4
          %220 = dma.hbm_to_vmem [thread:$0]  (%p209), %s212, %s216, %s215, %s196, 384, 384, 24
        $region36: #{tpu_custom_call.1} parent=31 // pred_fallthru
          _
      $region32: #{tpu_custom_call.1} parent=5 // pred_fallthru
        _
      %p221 = scmp.le.s32.totalorder 1, %s15
      %p222 = scmp.lt.s32.totalorder %s15, 5
      %p223 = pnand %p221, %p222
      %p224 = pneg %p223
      // Predicated region
      $region37: #{tpu_custom_call.1} parent=5 // pred_check
        _
      $region38: #{tpu_custom_call.1} parent=5 // pred_check_branch
        %226 = sbr.rel (%p223) target = $region40
      $region39: #{tpu_custom_call.1} parent=5 // pred_region
        %s227 = ssub.s32 %s15, 1
        %s228 = sand.u32 %s28, 1
        %s229 = scalar_lea.sflag [#allocation3], %s228
        %s230 = sand.u32 %s28, 1
        %s231 = smul.addr %s230, 168
        %s232 = scalar_lea.vmem [#allocation2], %s231
        // Predicated region
        $region41: #{tpu_custom_call.1} parent=39 // pred_check
          %p233 = pneg %p41
        $region42: #{tpu_custom_call.1} parent=39 // pred_check_branch
          %235 = sbr.rel (%p233) target = $region44
        $region43: #{tpu_custom_call.1} parent=39 // pred_region
          %236 = dma.done %s229, 2688
        $region44: #{tpu_custom_call.1} parent=39 // pred_fallthru
          _
        // Predicated region
        $region45: #{tpu_custom_call.1} parent=39 // pred_check
          %p237 = pneg %p62
        $region46: #{tpu_custom_call.1} parent=39 // pred_check_branch
          %239 = sbr.rel (%p237) target = $region48
        $region47: #{tpu_custom_call.1} parent=39 // pred_region
          %240 = dma.done [#allocation5], 6016
        $region48: #{tpu_custom_call.1} parent=39 // pred_fallthru
          _
        %s241 = sand.u32 %s28, 1
        %s242 = scalar_lea.sflag [#allocation3], %s241
        %s243 = sand.u32 %s28, 1
        %s244 = smul.addr %s243, 168
        %s245 = scalar_lea.vmem [#allocation2], %s244
        %p246 = pneg %p41
        %p247 = pneg %p38
        %p248 = pneg %p62
        %p249 = pneg %p59
        %p250 = pneg %p83
        %p251 = pneg %p80
        %p252 = pneg %p104
        %p253 = pneg %p101
        %p254 = pneg %p125
        %p255 = pneg %p122
        %p256 = pneg %p151
        %p257 = pneg %p148
        %s258 = sand.u32 %s138, 1
        %s259 = sand.u32 %s138, 1
        %s260 = smul.addr %s259, 56
        %s261 = scalar_lea.vmem [#allocation6], %s260
        %s262 = smul.u32 7, %s20
        %s263 = ssub.s32 25, %s262
        %p264 = scmp.lt.s32.totalorder %s263, 7
        %s265 = scalar_select %p264, %s263, 7
        %s266 = smul.u32 128, %s265
        %s267 = smul.u32 %s266, 3
        %s268 = smul.u32 7, %s20
        %s269 = ssub.s32 25, %s268
        %p270 = scmp.lt.s32.totalorder %s269, 7
        %s271 = scalar_select %p270, %s269, 7
        %s272 = smul.u32 128, %s271
        %v273 = vld [vmem:[%s232] sm:$0xff]
        %v274 = vld [vmem:[%s232 + $0x8] sm:$0xff]
        %v275 = vld [vmem:[%s232 + $0x10] sm:$0xff]
        %v276 = vld [vmem:[%s232 + $0x18] sm:$0xff]
        %v277 = vld [vmem:[%s232 + $0x20] sm:$0xff]
        %v278 = vld [vmem:[%s232 + $0x28] sm:$0xff]
        %v279 = vld [vmem:[%s232 + $0x30] sm:$0xff]
        %v280 = vld [vmem:[%s232 + $0x38] sm:$0xff]
        %v281 = vld [vmem:[%s232 + $0x40] sm:$0xff]
        %v282 = vld [vmem:[%s232 + $0x48] sm:$0xff]
        %v283 = vld [vmem:[%s232 + $0x50] sm:$0xff]
        %v284 = vld [vmem:[%s232 + $0x58] sm:$0xff]
        %v285 = vld [vmem:[%s232 + $0x60] sm:$0xff]
        %v286 = vld [vmem:[%s232 + $0x68] sm:$0xff]
        %v287 = vld [vmem:[%s232 + $0x70] sm:$0xff]
        %v288 = vld [vmem:[%s232 + $0x78] sm:$0xff]
        %v289 = vld [vmem:[%s232 + $0x80] sm:$0xff]
        %v290 = vld [vmem:[%s232 + $0x88] sm:$0xff]
        %v291 = vld [vmem:[%s232 + $0x90] sm:$0xff]
        %v292 = vld [vmem:[%s232 + $0x98] sm:$0xff]
        %v293 = vld [vmem:[%s232 + $0xa0] sm:$0xff]
        %v294 = vld [vmem:[#allocation4] sm:$0xff]
        %v295 = vld [vmem:[#allocation4 + $0x8] sm:$0xff]
        %v296 = vld [vmem:[#allocation4 + $0x10] sm:$0xff]
        %v297 = vld [vmem:[#allocation4 + $0x18] sm:$0xff]
        %v298 = vld [vmem:[#allocation4 + $0x20] sm:$0xff]
        %v299 = vld [vmem:[#allocation4 + $0x28] sm:$0xff]
        %v300 = vld [vmem:[#allocation4 + $0x30] sm:$0xff]
        %v301 = vld [vmem:[#allocation4 + $0x38] sm:$0xff]
        %v302 = vld [vmem:[#allocation4 + $0x40] sm:$0xff]
        %v303 = vld [vmem:[#allocation4 + $0x48] sm:$0xff]
        %v304 = vld [vmem:[#allocation4 + $0x50] sm:$0xff]
        %v305 = vld [vmem:[#allocation4 + $0x58] sm:$0xff]
        %v306 = vld [vmem:[#allocation4 + $0x60] sm:$0xff]
        %v307 = vld [vmem:[#allocation4 + $0x68] sm:$0xff]
        %v308 = vld [vmem:[#allocation4 + $0x70] sm:$0xff]
        %v309 = vld [vmem:[#allocation4 + $0x78] sm:$0xff]
        %v310 = vld [vmem:[#allocation4 + $0x80] sm:$0xff]
        %v311 = vld [vmem:[#allocation4 + $0x88] sm:$0xff]
        %v312 = vld [vmem:[#allocation4 + $0x90] sm:$0xff]
        %v313 = vld [vmem:[#allocation4 + $0x98] sm:$0xff]
        %v314 = vld [vmem:[#allocation4 + $0xa0] sm:$0xff]
        %v315 = vld [vmem:[#allocation4 + $0xa8] sm:$0xff]
        %v316 = vld [vmem:[#allocation4 + $0xb0] sm:$0xff]
        %v317 = vld [vmem:[#allocation4 + $0xb8] sm:$0xff]
        %v318 = vld [vmem:[#allocation4 + $0xc0] sm:$0xff]
        %v319 = vld [vmem:[#allocation4 + $0xc8] sm:$0xff]
        %v320 = vld [vmem:[#allocation4 + $0xd0] sm:$0xff]
        %v321 = vld [vmem:[#allocation4 + $0xd8] sm:$0xff]
        %v322 = vld [vmem:[#allocation4 + $0xe0] sm:$0xff]
        %v323 = vld [vmem:[#allocation4 + $0xe8] sm:$0xff]
        %v324 = vld [vmem:[#allocation4 + $0xf0] sm:$0xff]
        %v325 = vld [vmem:[#allocation4 + $0xf8] sm:$0xff]
        %v326 = vld [vmem:[#allocation4 + $0x100] sm:$0xff]
        %v327 = vld [vmem:[#allocation4 + $0x108] sm:$0xff]
        %v328 = vld [vmem:[#allocation4 + $0x110] sm:$0xff]
        %v329 = vld [vmem:[#allocation4 + $0x118] sm:$0xff]
        %v330 = vld [vmem:[#allocation4 + $0x120] sm:$0xff]
        %v331 = vld [vmem:[#allocation4 + $0x128] sm:$0xff]
        %v332 = vld [vmem:[#allocation4 + $0x130] sm:$0xff]
        %v333 = vld [vmem:[#allocation4 + $0x138] sm:$0xff]
        %v334 = vld [vmem:[#allocation4 + $0x140] sm:$0xff]
        %v335 = vld [vmem:[#allocation4 + $0x148] sm:$0xff]
        %v336 = vld [vmem:[#allocation4 + $0x150] sm:$0xff]
        %v337 = vld [vmem:[#allocation4 + $0x158] sm:$0xff]
        %v338 = vld [vmem:[#allocation4 + $0x160] sm:$0xff]
        %v339 = vld [vmem:[#allocation4 + $0x168] sm:$0xff]
        %v340 = vld [vmem:[#allocation4 + $0x170] sm:$0xf]
        %v341 = vld [vmem:[%s2] sm:$0x1]
        %v343 = vlaneseq
        %v344 = vshrl.u32 %v343, 7
        %v345 = vsub.s32 0, %v344
        %v346 = vrot.slane %v341, %v345
        %vm348 = vcmask 949248
        %v350 = vsel %vm348, %v275, 0
        %v353 = vsel %vm348, %v278, 0
        %v356 = vsel %vm348, %v281, 0
        %v359 = vsel %vm348, %v284, 0
        %v362 = vsel %vm348, %v287, 0
        %v365 = vsel %vm348, %v290, 0
        %v368 = vsel %vm348, %v293, 0
        %vm370 = vcmask 1043456
        %v372 = vsel %vm370, %v340, 0
        %374 = vmatprep.subr.mxu0 0.0
        %375 = vmatpush1.msra.mxu0 %v309
        %376 = vmatprep.subr.mxu0 0.0
        %377 = vmatpush1.msra.mxu0 %v308
        %378 = vmatprep.subr.mxu0 0.0
        %379 = vmatpush1.msra.mxu0 %v307
        %380 = vmatprep.subr.mxu0 0.0
        %381 = vmatpush1.msra.mxu0 %v306
        %382 = vmatprep.subr.mxu0 0.0
        %383 = vmatpush1.msra.mxu0 %v305
        %384 = vmatprep.subr.mxu0 0.0
        %385 = vmatpush1.msra.mxu0 %v304
        %386 = vmatprep.subr.mxu0 0.0
        %387 = vmatpush1.msra.mxu0 %v303
        %388 = vmatprep.subr.mxu0 0.0
        %389 = vmatpush1.msra.mxu0 %v302
        %390 = vmatprep.subr.mxu0 0.0
        %391 = vmatpush1.msra.mxu0 %v301
        %392 = vmatprep.subr.mxu0 0.0
        %393 = vmatpush1.msra.mxu0 %v300
        %394 = vmatprep.subr.mxu0 0.0
        %395 = vmatpush1.msra.mxu0 %v299
        %396 = vmatprep.subr.mxu0 0.0
        %397 = vmatpush1.msra.mxu0 %v298
        %398 = vmatprep.subr.mxu0 0.0
        %399 = vmatpush1.msra.mxu0 %v297
        %400 = vmatprep.subr.mxu0 0.0
        %401 = vmatpush1.msra.mxu0 %v296
        %402 = vmatprep.subr.mxu0 0.0
        %403 = vmatpush1.msra.mxu0 %v295
        %404 = vmatprep.subr.mxu0 0.0
        %405 = vmatpush1.msra.mxu0 %v294
        %406 = vmatprep.subr.mxu0 0.0
        %407 = vmatpush2.msra.mxu0 %v325
        %408 = vmatprep.subr.mxu0 0.0
        %409 = vmatpush2.msra.mxu0 %v324
        %410 = vmatprep.subr.mxu0 0.0
        %411 = vmatpush2.msra.mxu0 %v323
        %412 = vmatprep.subr.mxu0 0.0
        %413 = vmatpush2.msra.mxu0 %v322
        %414 = vmatprep.subr.mxu0 0.0
        %415 = vmatpush2.msra.mxu0 %v321
        %416 = vmatprep.subr.mxu0 0.0
        %417 = vmatpush2.msra.mxu0 %v320
        %418 = vmatprep.subr.mxu0 0.0
        %419 = vmatpush2.msra.mxu0 %v319
        %420 = vmatprep.subr.mxu0 0.0
        %421 = vmatpush2.msra.mxu0 %v318
        %422 = vmatprep.subr.mxu0 0.0
        %423 = vmatpush2.msra.mxu0 %v317
        %424 = vmatprep.subr.mxu0 0.0
        %425 = vmatpush2.msra.mxu0 %v316
        %426 = vmatprep.subr.mxu0 0.0
        %427 = vmatpush2.msra.mxu0 %v315
        %428 = vmatprep.subr.mxu0 0.0
        %429 = vmatpush2.msra.mxu0 %v314
        %430 = vmatprep.subr.mxu0 0.0
        %431 = vmatpush2.msra.mxu0 %v313
        %432 = vmatprep.subr.mxu0 0.0
        %433 = vmatpush2.msra.mxu0 %v312
        %434 = vmatprep.subr.mxu0 0.0
        %435 = vmatpush2.msra.mxu0 %v311
        %436 = vmatprep.subr.mxu0 0.0
        %437 = vmatpush2.msra.mxu0 %v310
        %438 = vmatprep.mubr.f32.mxu0 %v274
        %439 = vmatmul.mubr.f32.gmra.mxu0 %v273
        %v440 = vpop.f32.mrf.mxu0
        %v441 = vadd.f32 %v346, %v440
        %v442 = vpop.f32.mrf.mxu0
        %443 = vmatprep.mubr.f32.mxu0 %v277
        %444 = vmatmul.mubr.f32.gmra.mxu0 %v276
        %v445 = vpop.f32.mrf.mxu0
        %v446 = vadd.f32 %v346, %v445
        %v447 = vpop.f32.mrf.mxu0
        %448 = vmatprep.mubr.f32.mxu0 %v280
        %449 = vmatmul.mubr.f32.gmra.mxu0 %v279
        %v450 = vpop.f32.mrf.mxu0
        %v451 = vadd.f32 %v346, %v450
        %v452 = vpop.f32.mrf.mxu0
        %453 = vmatprep.mubr.f32.mxu0 %v283
        %454 = vmatmul.mubr.f32.gmra.mxu0 %v282
        %v455 = vpop.f32.mrf.mxu0
        %v456 = vadd.f32 %v346, %v455
        %v457 = vpop.f32.mrf.mxu0
        %458 = vmatprep.mubr.f32.mxu0 %v286
        %459 = vmatmul.mubr.f32.gmra.mxu0 %v285
        %v460 = vpop.f32.mrf.mxu0
        %v461 = vadd.f32 %v346, %v460
        %v462 = vpop.f32.mrf.mxu0
        %463 = vmatprep.mubr.f32.mxu0 %v289
        %464 = vmatmul.mubr.f32.gmra.mxu0 %v288
        %v465 = vpop.f32.mrf.mxu0
        %v466 = vadd.f32 %v346, %v465
        %v467 = vpop.f32.mrf.mxu0
        %468 = vmatprep.mubr.f32.mxu0 %v292
        %469 = vmatmul.mubr.f32.gmra.mxu0 %v291
        %v470 = vpop.f32.mrf.mxu0
        %v471 = vadd.f32 %v346, %v470
        %v472 = vpop.f32.mrf.mxu0
        %473 = vdwg.mxu0
        %474 = vmatprep.subr.mxu0 0.0
        %475 = vmatpush1.msra.mxu0 0.0
        %476 = vmatprep.subr.mxu0 0.0
        %477 = vmatpush1.msra.mxu0 %v372
        %478 = vmatprep.subr.mxu0 0.0
        %479 = vmatpush1.msra.mxu0 %v339
        %480 = vmatprep.subr.mxu0 0.0
        %481 = vmatpush1.msra.mxu0 %v338
        %482 = vmatprep.subr.mxu0 0.0
        %483 = vmatpush1.msra.mxu0 %v337
        %484 = vmatprep.subr.mxu0 0.0
        %485 = vmatpush1.msra.mxu0 %v336
        %486 = vmatprep.subr.mxu0 0.0
        %487 = vmatpush1.msra.mxu0 %v335
        %488 = vmatprep.subr.mxu0 0.0
        %489 = vmatpush1.msra.mxu0 %v334
        %490 = vmatprep.subr.mxu0 0.0
        %491 = vmatpush1.msra.mxu0 %v333
        %492 = vmatprep.subr.mxu0 0.0
        %493 = vmatpush1.msra.mxu0 %v332
        %494 = vmatprep.subr.mxu0 0.0
        %495 = vmatpush1.msra.mxu0 %v331
        %496 = vmatprep.subr.mxu0 0.0
        %497 = vmatpush1.msra.mxu0 %v330
        %498 = vmatprep.subr.mxu0 0.0
        %499 = vmatpush1.msra.mxu0 %v329
        %500 = vmatprep.subr.mxu0 0.0
        %501 = vmatpush1.msra.mxu0 %v328
        %502 = vmatprep.subr.mxu0 0.0
        %503 = vmatpush1.msra.mxu0 %v327
        %504 = vmatprep.subr.mxu0 0.0
        %505 = vmatpush1.msra.mxu0 %v326
        %506 = vmatprep.subr.mxu0 0.0
        %507 = vmatpush2.msra.mxu0 0.0
        %508 = vmatprep.subr.mxu0 0.0
        %509 = vmatpush2.msra.mxu0 0.0
        %510 = vmatprep.subr.mxu0 0.0
        %511 = vmatpush2.msra.mxu0 0.0
        %512 = vmatprep.subr.mxu0 0.0
        %513 = vmatpush2.msra.mxu0 0.0
        %514 = vmatprep.subr.mxu0 0.0
        %515 = vmatpush2.msra.mxu0 0.0
        %516 = vmatprep.subr.mxu0 0.0
        %517 = vmatpush2.msra.mxu0 0.0
        %518 = vmatprep.subr.mxu0 0.0
        %519 = vmatpush2.msra.mxu0 0.0
        %520 = vmatprep.subr.mxu0 0.0
        %521 = vmatpush2.msra.mxu0 0.0
        %522 = vmatprep.subr.mxu0 0.0
        %523 = vmatpush2.msra.mxu0 0.0
        %524 = vmatprep.subr.mxu0 0.0
        %525 = vmatpush2.msra.mxu0 0.0
        %526 = vmatprep.subr.mxu0 0.0
        %527 = vmatpush2.msra.mxu0 0.0
        %528 = vmatprep.subr.mxu0 0.0
        %529 = vmatpush2.msra.mxu0 0.0
        %530 = vmatprep.subr.mxu0 0.0
        %531 = vmatpush2.msra.mxu0 0.0
        %532 = vmatprep.subr.mxu0 0.0
        %533 = vmatpush2.msra.mxu0 0.0
        %534 = vmatprep.subr.mxu0 0.0
        %535 = vmatpush2.msra.mxu0 0.0
        %536 = vmatprep.subr.mxu0 0.0
        %537 = vmatpush2.msra.mxu0 0.0
        %538 = vmatprep.mubr.f32.mxu0 0.0
        %539 = vmatmul.mubr.f32.gmra.mxu0 %v350
        %v540 = vpop.f32.mrf.mxu0
        %v541 = vadd.f32 %v441, %v540
        %v542 = vpop.f32.mrf.mxu0
        %543 = vmatprep.mubr.f32.mxu0 0.0
        %544 = vmatmul.mubr.f32.gmra.mxu0 %v353
        %v545 = vpop.f32.mrf.mxu0
        %v546 = vadd.f32 %v446, %v545
        %v547 = vpop.f32.mrf.mxu0
        %548 = vmatprep.mubr.f32.mxu0 0.0
        %549 = vmatmul.mubr.f32.gmra.mxu0 %v356
        %v550 = vpop.f32.mrf.mxu0
        %v551 = vadd.f32 %v451, %v550
        %v552 = vpop.f32.mrf.mxu0
        %553 = vmatprep.mubr.f32.mxu0 0.0
        %554 = vmatmul.mubr.f32.gmra.mxu0 %v359
        %v555 = vpop.f32.mrf.mxu0
        %v556 = vadd.f32 %v456, %v555
        %v557 = vpop.f32.mrf.mxu0
        %558 = vmatprep.mubr.f32.mxu0 0.0
        %559 = vmatmul.mubr.f32.gmra.mxu0 %v362
        %v560 = vpop.f32.mrf.mxu0
        %v561 = vadd.f32 %v461, %v560
        %v562 = vpop.f32.mrf.mxu0
        %563 = vmatprep.mubr.f32.mxu0 0.0
        %564 = vmatmul.mubr.f32.gmra.mxu0 %v365
        %v565 = vpop.f32.mrf.mxu0
        %v566 = vadd.f32 %v466, %v565
        %v567 = vpop.f32.mrf.mxu0
        %568 = vmatprep.mubr.f32.mxu0 0.0
        %569 = vmatmul.mubr.f32.gmra.mxu0 %v368
        %v570 = vpop.f32.mrf.mxu0
        %v571 = vadd.f32 %v471, %v570
        %v572 = vpop.f32.mrf.mxu0
        %573 = vdwg.mxu0
        %v574 = vmax.f32 %v541, 0.0
        %v575 = vmax.f32 %v546, 0.0
        %v576 = vmax.f32 %v551, 0.0
        %v577 = vmax.f32 %v556, 0.0
        %v578 = vmax.f32 %v561, 0.0
        %v579 = vmax.f32 %v566, 0.0
        %v580 = vmax.f32 %v571, 0.0
        %v581 = vld [vmem:[%s3] sm:$0xff]
        %v582 = vld [vmem:[%s3 + $0x8] sm:$0xff]
        %v583 = vld [vmem:[%s3 + $0x10] sm:$0xff]
        %v584 = vld [vmem:[%s3 + $0x18] sm:$0xff]
        %v585 = vld [vmem:[%s3 + $0x20] sm:$0xff]
        %v586 = vld [vmem:[%s3 + $0x28] sm:$0xff]
        %v587 = vld [vmem:[%s3 + $0x30] sm:$0xff]
        %v588 = vld [vmem:[%s3 + $0x38] sm:$0xff]
        %v589 = vld [vmem:[%s3 + $0x40] sm:$0xff]
        %v590 = vld [vmem:[%s3 + $0x48] sm:$0xff]
        %v591 = vld [vmem:[%s3 + $0x50] sm:$0xff]
        %v592 = vld [vmem:[%s3 + $0x58] sm:$0xff]
        %v593 = vld [vmem:[%s3 + $0x60] sm:$0xff]
        %v594 = vld [vmem:[%s3 + $0x68] sm:$0xff]
        %v595 = vld [vmem:[%s3 + $0x70] sm:$0xff]
        %v596 = vld [vmem:[%s3 + $0x78] sm:$0xff]
        %v597 = vld [vmem:[%s4] sm:$0x1]
        %v599 = vlaneseq
        %v600 = vshrl.u32 %v599, 7
        %v601 = vsub.s32 0, %v600
        %v602 = vrot.slane %v597, %v601
        %604 = vmatprep.subr.mxu0 0.0
        %605 = vmatpush1.msra.mxu0 %v596
        %606 = vmatprep.subr.mxu0 0.0
        %607 = vmatpush1.msra.mxu0 %v595
        %608 = vmatprep.subr.mxu0 0.0
        %609 = vmatpush1.msra.mxu0 %v594
        %610 = vmatprep.subr.mxu0 0.0
        %611 = vmatpush1.msra.mxu0 %v593
        %612 = vmatprep.subr.mxu0 0.0
        %613 = vmatpush1.msra.mxu0 %v592
        %614 = vmatprep.subr.mxu0 0.0
        %615 = vmatpush1.msra.mxu0 %v591
        %616 = vmatprep.subr.mxu0 0.0
        %617 = vmatpush1.msra.mxu0 %v590
        %618 = vmatprep.subr.mxu0 0.0
        %619 = vmatpush1.msra.mxu0 %v589
        %620 = vmatprep.subr.mxu0 0.0
        %621 = vmatpush1.msra.mxu0 %v588
        %622 = vmatprep.subr.mxu0 0.0
        %623 = vmatpush1.msra.mxu0 %v587
        %624 = vmatprep.subr.mxu0 0.0
        %625 = vmatpush1.msra.mxu0 %v586
        %626 = vmatprep.subr.mxu0 0.0
        %627 = vmatpush1.msra.mxu0 %v585
        %628 = vmatprep.subr.mxu0 0.0
        %629 = vmatpush1.msra.mxu0 %v584
        %630 = vmatprep.subr.mxu0 0.0
        %631 = vmatpush1.msra.mxu0 %v583
        %632 = vmatprep.subr.mxu0 0.0
        %633 = vmatpush1.msra.mxu0 %v582
        %634 = vmatprep.subr.mxu0 0.0
        %635 = vmatpush1.msra.mxu0 %v581
        %636 = vmatprep.subr.mxu0 0.0
        %637 = vmatpush2.msra.mxu0 0.0
        %638 = vmatprep.subr.mxu0 0.0
        %639 = vmatpush2.msra.mxu0 0.0
        %640 = vmatprep.subr.mxu0 0.0
        %641 = vmatpush2.msra.mxu0 0.0
        %642 = vmatprep.subr.mxu0 0.0
        %643 = vmatpush2.msra.mxu0 0.0
        %644 = vmatprep.subr.mxu0 0.0
        %645 = vmatpush2.msra.mxu0 0.0
        %646 = vmatprep.subr.mxu0 0.0
        %647 = vmatpush2.msra.mxu0 0.0
        %648 = vmatprep.subr.mxu0 0.0
        %649 = vmatpush2.msra.mxu0 0.0
        %650 = vmatprep.subr.mxu0 0.0
        %651 = vmatpush2.msra.mxu0 0.0
        %652 = vmatprep.subr.mxu0 0.0
        %653 = vmatpush2.msra.mxu0 0.0
        %654 = vmatprep.subr.mxu0 0.0
        %655 = vmatpush2.msra.mxu0 0.0
        %656 = vmatprep.subr.mxu0 0.0
        %657 = vmatpush2.msra.mxu0 0.0
        %658 = vmatprep.subr.mxu0 0.0
        %659 = vmatpush2.msra.mxu0 0.0
        %660 = vmatprep.subr.mxu0 0.0
        %661 = vmatpush2.msra.mxu0 0.0
        %662 = vmatprep.subr.mxu0 0.0
        %663 = vmatpush2.msra.mxu0 0.0
        %664 = vmatprep.subr.mxu0 0.0
        %665 = vmatpush2.msra.mxu0 0.0
        %666 = vmatprep.subr.mxu0 0.0
        %667 = vmatpush2.msra.mxu0 0.0
        %668 = vmatprep.mubr.f32.mxu0 0.0
        %669 = vmatmul.mubr.f32.gmra.mxu0 %v574
        %v670 = vpop.f32.mrf.mxu0
        %v671 = vadd.f32 %v602, %v670
        %v672 = vpop.f32.mrf.mxu0
        %673 = vmatprep.mubr.f32.mxu0 0.0
        %674 = vmatmul.mubr.f32.gmra.mxu0 %v575
        %v675 = vpop.f32.mrf.mxu0
        %v676 = vadd.f32 %v602, %v675
        %v677 = vpop.f32.mrf.mxu0
        %678 = vmatprep.mubr.f32.mxu0 0.0
        %679 = vmatmul.mubr.f32.gmra.mxu0 %v576
        %v680 = vpop.f32.mrf.mxu0
        %v681 = vadd.f32 %v602, %v680
        %v682 = vpop.f32.mrf.mxu0
        %683 = vmatprep.mubr.f32.mxu0 0.0
        %684 = vmatmul.mubr.f32.gmra.mxu0 %v577
        %v685 = vpop.f32.mrf.mxu0
        %v686 = vadd.f32 %v602, %v685
        %v687 = vpop.f32.mrf.mxu0
        %688 = vmatprep.mubr.f32.mxu0 0.0
        %689 = vmatmul.mubr.f32.gmra.mxu0 %v578
        %v690 = vpop.f32.mrf.mxu0
        %v691 = vadd.f32 %v602, %v690
        %v692 = vpop.f32.mrf.mxu0
        %693 = vmatprep.mubr.f32.mxu0 0.0
        %694 = vmatmul.mubr.f32.gmra.mxu0 %v579
        %v695 = vpop.f32.mrf.mxu0
        %v696 = vadd.f32 %v602, %v695
        %v697 = vpop.f32.mrf.mxu0
        %698 = vmatprep.mubr.f32.mxu0 0.0
        %699 = vmatmul.mubr.f32.gmra.mxu0 %v580
        %v700 = vpop.f32.mrf.mxu0
        %v701 = vadd.f32 %v602, %v700
        %v702 = vpop.f32.mrf.mxu0
        %703 = vdwg.mxu0
        %v704 = vxor.u32 %v671, 2147483648
        %v705 = vxor.u32 %v676, 2147483648
        %v706 = vxor.u32 %v681, 2147483648
        %v707 = vxor.u32 %v686, 2147483648
        %v708 = vxor.u32 %v691, 2147483648
        %v709 = vxor.u32 %v696, 2147483648
        %v710 = vxor.u32 %v701, 2147483648
        %v711 = vmul.f32 %v704, 1.442695
        %v712 = vpow.pop %v711
        %v713 = vmul.f32 %v705, 1.442695
        %v714 = vpow.pop %v713
        %v715 = vmul.f32 %v706, 1.442695
        %v716 = vpow.pop %v715
        %v717 = vmul.f32 %v707, 1.442695
        %v718 = vpow.pop %v717
        %v719 = vmul.f32 %v708, 1.442695
        %v720 = vpow.pop %v719
        %v721 = vmul.f32 %v709, 1.442695
        %v722 = vpow.pop %v721
        %v723 = vmul.f32 %v710, 1.442695
        %v724 = vpow.pop %v723
        %v725 = vadd.f32 %v712, 1.0
        %v726 = vadd.f32 %v714, 1.0
        %v727 = vadd.f32 %v716, 1.0
        %v728 = vadd.f32 %v718, 1.0
        %v729 = vadd.f32 %v720, 1.0
        %v730 = vadd.f32 %v722, 1.0
        %v731 = vadd.f32 %v724, 1.0
        %v732 = vrcp.pop %v725
        %v733 = vmul.f32 1.0, %v732
        %v734 = vrcp.pop %v726
        %v735 = vmul.f32 1.0, %v734
        %v736 = vrcp.pop %v727
        %v737 = vmul.f32 1.0, %v736
        %v738 = vrcp.pop %v728
        %v739 = vmul.f32 1.0, %v738
        %v740 = vrcp.pop %v729
        %v741 = vmul.f32 1.0, %v740
        %v742 = vrcp.pop %v730
        %v743 = vmul.f32 1.0, %v742
        %v744 = vrcp.pop %v731
        %v745 = vmul.f32 1.0, %v744
        %vm746 = vcmask 424960
        %747 = vst.msk [vmem:[%s261] sm:$0xff] %vm746, %v733
        %748 = vst.msk [vmem:[%s261 + $0x8] sm:$0xff] %vm746, %v735
        %749 = vst.msk [vmem:[%s261 + $0x10] sm:$0xff] %vm746, %v737
        %750 = vst.msk [vmem:[%s261 + $0x18] sm:$0xff] %vm746, %v739
        %751 = vst.msk [vmem:[%s261 + $0x20] sm:$0xff] %vm746, %v741
        %752 = vst.msk [vmem:[%s261 + $0x28] sm:$0xff] %vm746, %v743
        %753 = vst.msk [vmem:[%s261 + $0x30] sm:$0xff] %vm746, %v745
        %s754 = sand.u32 %s138, 1
        %s755 = sand.u32 %s138, 1
        %s756 = smul.addr %s755, 56
        %s757 = scalar_lea.vmem [#allocation6], %s756
        // Predicated region
        $region49: #{tpu_custom_call.1} parent=39 // pred_check
          %p758 = pneg %p148
        $region50: #{tpu_custom_call.1} parent=39 // pred_check_branch
          %760 = sbr.rel (%p758) target = $region52
        $region51: #{tpu_custom_call.1} parent=39 // pred_region
          %s761 = smul.u32 7, %s20
          %s762 = ssub.s32 25, %s761
          %p763 = scmp.lt.s32.totalorder %s762, 7
          %s764 = scalar_select %p763, %s762, 7
          %s765 = smul.u32 128, %s764
          %p766 = scmp.ne.s32.totalorder 0, %s765
          %s767 = smul.addr %s761, 8
          %s768 = scalar_lea.vmem %s5, %s767
          // Predicated region
          $region53: #{tpu_custom_call.1} parent=51 // pred_check
            %p769 = pneg %p766
          $region54: #{tpu_custom_call.1} parent=51 // pred_check_branch
            %771 = sbr.rel (%p769) target = $region56
          $region55: #{tpu_custom_call.1} parent=51 // pred_region
            // Predicated region
            $region57: #{tpu_custom_call.1} parent=55 // pred_check
              _
            $region58: #{tpu_custom_call.1} parent=55 // pred_check_branch
              %773 = sbr.rel (0) target = $region60
            $region59: #{tpu_custom_call.1} parent=55 // pred_region
              // Predicated region
              $region79: #{tpu_custom_call.1} parent=59 // pred_check
                _
              $region80: #{tpu_custom_call.1} parent=59 // pred_check_branch
                %836 = sbr.rel (0) target = $region82
              $region81: #{tpu_custom_call.1} parent=59 // pred_region
                %s837 = sdiv.u32.pop %s764, 7
                %s838 = srem.u32.pop %s764, 7
                // While loop
                $region83: #{tpu_custom_call.1} parent=81 // loop_pre_header
                  _
                $region84: #{tpu_custom_call.1} parent=81 // loop_header
                  %s840 = sphi 0, %s842
                  %p841 = scmp.ge.s32.totalorder %s840, %s837
                  %s845 = sphi 0, %s864
                  %s846 = sphi %s757, %s867
                  %s847 = sphi %s768, %s868
                $region85: #{tpu_custom_call.1} parent=81 // loop_header_branch
                  %844 = sbr.rel (%p841) target = $region89
                $region86: #{tpu_custom_call.1} parent=81 // loop_body
                  %v848 = vld [vmem:[%s846] sm:$0xff]
                  %849 = vst [vmem:[%s847] sm:$0xff] %v848
                  %v850 = vld [vmem:[%s846 + $0x8] sm:$0xff]
                  %851 = vst [vmem:[%s847 + $0x8] sm:$0xff] %v850
                  %v852 = vld [vmem:[%s846 + $0x10] sm:$0xff]
                  %853 = vst [vmem:[%s847 + $0x10] sm:$0xff] %v852
                  %v854 = vld [vmem:[%s846 + $0x18] sm:$0xff]
                  %855 = vst [vmem:[%s847 + $0x18] sm:$0xff] %v854
                  %v856 = vld [vmem:[%s846 + $0x20] sm:$0xff]
                  %857 = vst [vmem:[%s847 + $0x20] sm:$0xff] %v856
                  %v858 = vld [vmem:[%s846 + $0x28] sm:$0xff]
                  %859 = vst [vmem:[%s847 + $0x28] sm:$0xff] %v858
                  %v860 = vld [vmem:[%s846 + $0x30] sm:$0xff]
                  %861 = vst [vmem:[%s847 + $0x30] sm:$0xff] %v860
                  %s862 = sadd.s32 1, %s845
                  %p863 = scmp.ge.s32.totalorder %s862, %s837
                  %s864 = scalar_select %p863, 0, %s862
                  %s865 = smul.u32 %s864, 56
                  %s866 = smul.u32 %s864, 56
                  %s867 = scalar_lea.vmem %s757, %s865 [#allocation6]
                  %s868 = scalar_lea.vmem %s768, %s866
                $region87: #{tpu_custom_call.1} parent=81 // loop_footer
                  %s842 = sadd.s32 %s840, 1
                $region88: #{tpu_custom_call.1} parent=81 // loop_footer_branch
                  %839 = sbr.rel target = $region84
                $region89: #{tpu_custom_call.1} parent=81 // loop_exit
                  _
                %s869 = sdiv.u32.pop %s764, 7
                %s870 = srem.u32.pop %s764, 7
                %s871 = smul.u32 %s869, 7
                %s872 = smul.u32 8, %s871
                %s873 = scalar_lea.vmem %s757, %s872 [#allocation6]
                %s874 = smul.u32 8, %s871
                %s875 = scalar_lea.vmem %s768, %s874
                // While loop
                $region90: #{tpu_custom_call.1} parent=81 // loop_pre_header
                  _
                $region91: #{tpu_custom_call.1} parent=81 // loop_header
                  %s877 = sphi 0, %s879
                  %p878 = scmp.ge.s32.totalorder %s877, %s870
                  %s882 = sphi 0, %s889
                  %s883 = sphi %s873, %s892
                  %s884 = sphi %s875, %s893
                $region92: #{tpu_custom_call.1} parent=81 // loop_header_branch
                  %881 = sbr.rel (%p878) target = $region96
                $region93: #{tpu_custom_call.1} parent=81 // loop_body
                  %v885 = vld [vmem:[%s883] sm:$0xff]
                  %886 = vst [vmem:[%s884] sm:$0xff] %v885
                  %s887 = sadd.s32 1, %s882
                  %p888 = scmp.ge.s32.totalorder %s887, %s870
                  %s889 = scalar_select %p888, 0, %s887
                  %s890 = smul.u32 %s889, 8
                  %s891 = smul.u32 %s889, 8
                  %s892 = scalar_lea.vmem %s873, %s890 [#allocation6]
                  %s893 = scalar_lea.vmem %s875, %s891
                $region94: #{tpu_custom_call.1} parent=81 // loop_footer
                  %s879 = sadd.s32 %s877, 1
                $region95: #{tpu_custom_call.1} parent=81 // loop_footer_branch
                  %876 = sbr.rel target = $region91
                $region96: #{tpu_custom_call.1} parent=81 // loop_exit
                  _
              $region82: #{tpu_custom_call.1} parent=59 // pred_fallthru
                _
              // Predicated region
              $region97: #{tpu_custom_call.1} parent=59 // pred_check
                _
              $region98: #{tpu_custom_call.1} parent=59 // pred_check_branch
                %895 = sbr.rel target = $region100
              $region99: #{tpu_custom_call.1} parent=59 // pred_region
                _
              $region100: #{tpu_custom_call.1} parent=59 // pred_fallthru
                _
            $region60: #{tpu_custom_call.1} parent=55 // pred_fallthru
              _
            // Predicated region
            $region61: #{tpu_custom_call.1} parent=55 // pred_check
              _
            $region62: #{tpu_custom_call.1} parent=55 // pred_check_branch
              %775 = sbr.rel target = $region64
            $region63: #{tpu_custom_call.1} parent=55 // pred_region
              %s777 = ssub.s32 256, 1
              %s778 = sdiv.u32.pop %s764, 7
              %s779 = srem.u32.pop %s764, 7
              // While loop
              $region65: #{tpu_custom_call.1} parent=63 // loop_pre_header
                _
              $region66: #{tpu_custom_call.1} parent=63 // loop_header
                %s781 = sphi 0, %s783
                %p782 = scmp.ge.s32.totalorder %s781, %s778
                %s786 = sphi 0, %s805
                %s787 = sphi %s757, %s808
                %s788 = sphi %s768, %s809
              $region67: #{tpu_custom_call.1} parent=63 // loop_header_branch
                %785 = sbr.rel (%p782) target = $region71
              $region68: #{tpu_custom_call.1} parent=63 // loop_body
                %v789 = vld [vmem:[%s787] sm:%s777]
                %790 = vst [vmem:[%s788] sm:%s777] %v789
                %v791 = vld [vmem:[%s787 + $0x8] sm:%s777]
                %792 = vst [vmem:[%s788 + $0x8] sm:%s777] %v791
                %v793 = vld [vmem:[%s787 + $0x10] sm:%s777]
                %794 = vst [vmem:[%s788 + $0x10] sm:%s777] %v793
                %v795 = vld [vmem:[%s787 + $0x18] sm:%s777]
                %796 = vst [vmem:[%s788 + $0x18] sm:%s777] %v795
                %v797 = vld [vmem:[%s787 + $0x20] sm:%s777]
                %798 = vst [vmem:[%s788 + $0x20] sm:%s777] %v797
                %v799 = vld [vmem:[%s787 + $0x28] sm:%s777]
                %800 = vst [vmem:[%s788 + $0x28] sm:%s777] %v799
                %v801 = vld [vmem:[%s787 + $0x30] sm:%s777]
                %802 = vst [vmem:[%s788 + $0x30] sm:%s777] %v801
                %s803 = sadd.s32 1, %s786
                %p804 = scmp.ge.s32.totalorder %s803, %s778
                %s805 = scalar_select %p804, 0, %s803
                %s806 = smul.u32 %s805, 56
                %s807 = smul.u32 %s805, 56
                %s808 = scalar_lea.vmem %s757, %s806 [#allocation6]
                %s809 = scalar_lea.vmem %s768, %s807
              $region69: #{tpu_custom_call.1} parent=63 // loop_footer
                %s783 = sadd.s32 %s781, 1
              $region70: #{tpu_custom_call.1} parent=63 // loop_footer_branch
                %780 = sbr.rel target = $region66
              $region71: #{tpu_custom_call.1} parent=63 // loop_exit
                _
              %s810 = sdiv.u32.pop %s764, 7
              %s811 = srem.u32.pop %s764, 7
              %s812 = smul.u32 %s810, 7
              %s813 = smul.u32 8, %s812
              %s814 = scalar_lea.vmem %s757, %s813 [#allocation6]
              %s815 = smul.u32 8, %s812
              %s816 = scalar_lea.vmem %s768, %s815
              // While loop
              $region72: #{tpu_custom_call.1} parent=63 // loop_pre_header
                _
              $region73: #{tpu_custom_call.1} parent=63 // loop_header
                %s818 = sphi 0, %s820
                %p819 = scmp.ge.s32.totalorder %s818, %s811
                %s823 = sphi 0, %s830
                %s824 = sphi %s814, %s833
                %s825 = sphi %s816, %s834
              $region74: #{tpu_custom_call.1} parent=63 // loop_header_branch
                %822 = sbr.rel (%p819) target = $region78
              $region75: #{tpu_custom_call.1} parent=63 // loop_body
                %v826 = vld [vmem:[%s824] sm:%s777]
                %827 = vst [vmem:[%s825] sm:%s777] %v826
                %s828 = sadd.s32 1, %s823
                %p829 = scmp.ge.s32.totalorder %s828, %s811
                %s830 = scalar_select %p829, 0, %s828
                %s831 = smul.u32 %s830, 8
                %s832 = smul.u32 %s830, 8
                %s833 = scalar_lea.vmem %s814, %s831 [#allocation6]
                %s834 = scalar_lea.vmem %s816, %s832
              $region76: #{tpu_custom_call.1} parent=63 // loop_footer
                %s820 = sadd.s32 %s818, 1
              $region77: #{tpu_custom_call.1} parent=63 // loop_footer_branch
                %817 = sbr.rel target = $region73
              $region78: #{tpu_custom_call.1} parent=63 // loop_exit
                _
            $region64: #{tpu_custom_call.1} parent=55 // pred_fallthru
              _
          $region56: #{tpu_custom_call.1} parent=51 // pred_fallthru
            _
          %896 = vnop
        $region52: #{tpu_custom_call.1} parent=39 // pred_fallthru
          _
      $region40: #{tpu_custom_call.1} parent=5 // pred_fallthru
        _
      %p897 = scmp.le.s32.totalorder 2, %s15
      // Predicated region
      $region101: #{tpu_custom_call.1} parent=5 // pred_check
        %p898 = pneg %p897
      $region102: #{tpu_custom_call.1} parent=5 // pred_check_branch
        %900 = sbr.rel (%p898) target = $region104
      $region103: #{tpu_custom_call.1} parent=5 // pred_region
        %s901 = ssub.s32 %s15, 2
        // Predicated region
        $region105: #{tpu_custom_call.1} parent=103 // pred_check
          %p902 = pneg %p154
        $region106: #{tpu_custom_call.1} parent=103 // pred_check_branch
          %904 = sbr.rel (%p902) target = $region108
        $region107: #{tpu_custom_call.1} parent=103 // pred_region
          %s905 = sand.u32 %s139, 1
          %s906 = sand.u32 %s139, 1
          %s907 = smul.addr %s906, 56
          %s908 = scalar_lea.vmem [#allocation6], %s907
        $region108: #{tpu_custom_call.1} parent=103 // pred_fallthru
          _
      $region104: #{tpu_custom_call.1} parent=5 // pred_fallthru
        _
    $region6: #{tpu_custom_call.1} parent=1 // loop_footer
      %s19 = sadd.s32 1, %s15
    $region7: #{tpu_custom_call.1} parent=1 // loop_footer_branch
      %14 = sbr.rel target = $region3
    $region8: #{tpu_custom_call.1} parent=1 // loop_exit
      _
    %909 = vsyncpa [#allocation3], 1
    %s910 = scalar_lea.sflag [#allocation3], 1
    %911 = vsyncpa %s910, 1
    %912 = vsyncpa [#allocation5], 1

</llo_original>
